<compile_context>
chip_gen: v6e
topology: v6e:2x2x1
jax: 0.10.0
libtpu: 0.0.40
codegen_flags: <defaults>
</compile_context>

<pallas_src>
import functools

import jax
import jax.numpy as jnp
import numpy as np
from jax.experimental import pallas as pl
from jax.experimental.pallas import tpu as pltpu

EPS = 1e-12                               # torch F.normalize default
_TARGET_BLOCK_BYTES = 2 * 1024 * 1024     # per pipeline buffer; (in+out) x 2 bufs ~ 8 MiB resident
_VMEM_LIMIT_BYTES = 32 * 1024 * 1024      # fits every generation's physical VMEM


def _l2norm_kernel(x_ref, o_ref, *, pack, d):
    """x_ref / o_ref: (tm, pack*d). Each contiguous group of `d` lanes is one logical row."""
    x = x_ref[...].astype(jnp.float32)
    eps2 = jnp.float32(EPS * EPS)
    if pack == 1:
        ss = jnp.sum(x * x, axis=-1, keepdims=True)
        inv = jax.lax.rsqrt(jnp.maximum(ss, eps2))
        o_ref[...] = (x * inv).astype(o_ref.dtype)
    else:
        # Static unroll over the `pack` lane-segments (pack = 128 // d); only basic,
        # guaranteed-lowering ops (static lane slices, lane reduce, broadcast multiply).
        for g in range(pack):
            seg = x[:, g * d:(g + 1) * d]
            ss = jnp.sum(seg * seg, axis=-1, keepdims=True)
            inv = jax.lax.rsqrt(jnp.maximum(ss, eps2))
            o_ref[:, g * d:(g + 1) * d] = (seg * inv).astype(o_ref.dtype)


def normalize_last_dim(x):
    """Equivalent of torch.nn.functional.normalize(x, p=2, dim=-1, eps=1e-12)."""
    orig_shape = x.shape
    d = int(orig_shape[-1])
    m = int(np.prod(orig_shape[:-1], dtype=np.int64))
    x2 = x.reshape(m, d)

    itemsize = jnp.dtype(x.dtype).itemsize
    sublane = max(8, 32 // itemsize)       # 8 for f32, 16 for bf16, 32 for int8/fp8

    # Lane-dense packing of short rows into 128-wide packed rows.
    pack = (128 // d) if (d < 128 and 128 % d == 0) else 1
    w = pack * d

    # Row tile (in packed rows): as large as fits the VMEM budget, sublane-aligned.
    tm = max(sublane, (_TARGET_BLOCK_BYTES // (w * itemsize)) // sublane * sublane)
    mp = -(-m // pack)                                  # packed rows before padding
    tm = min(tm, -(-mp // sublane) * sublane)

    # Pad rows so packed rows divide evenly into tiles (zero rows normalize to zero).
    mp_pad = -(-mp // tm) * tm
    m_pad = mp_pad * pack
    if m_pad != m:
        x2 = jnp.pad(x2, ((0, m_pad - m), (0, 0)))
    xp = x2.reshape(mp_pad, w)                          # free reshape (rows contiguous)

    grid = (mp_pad // tm,)
    kernel = functools.partial(_l2norm_kernel, pack=pack, d=d)

    out = pl.pallas_call(
        kernel,
        out_shape=jax.ShapeDtypeStruct((mp_pad, w), x.dtype),
        grid_spec=pltpu.PrefetchScalarGridSpec(
            num_scalar_prefetch=0,
            grid=grid,
            in_specs=[pl.BlockSpec((tm, w), lambda i: (i, 0))],
            out_specs=pl.BlockSpec((tm, w), lambda i: (i, 0)),
        ),
        compiler_params=pltpu.CompilerParams(
            dimension_semantics=("parallel",),
            vmem_limit_bytes=_VMEM_LIMIT_BYTES,
        ),
        cost_estimate=pl.CostEstimate(
            flops=3 * m_pad * d,
            transcendentals=m_pad,
            bytes_accessed=2 * mp_pad * w * itemsize,
        ),
    )(xp)

    out = out.reshape(m_pad, d)
    if m_pad != m:
        out = out[:m]
    return out.reshape(orig_shape)


if __name__ == "__main__":
    key = jax.random.PRNGKey(0)
    # Small NCHW-style input; module normalizes along dim=-1 regardless of rank.
    x = jax.random.normal(key, (2, 4, 16, 16), dtype=jnp.float32)

    y = jax.block_until_ready(normalize_last_dim(x))

    # Reference (same semantics as torch F.normalize: x / clamp_min(||x||_2, eps)).
    norm = jnp.sqrt(jnp.sum(x * x, axis=-1, keepdims=True))
    ref = x / jnp.maximum(norm, EPS)
    assert jnp.allclose(y, ref, atol=1e-6, rtol=1e-5), float(jnp.max(jnp.abs(y - ref)))

    print("KERNEL_OK")
</pallas_src>

<mosaic_0001>
module attributes {stable_mosaic.version = 11 : i64} {
  func.func @_l2norm_kernel(%arg0: i32, %arg1: memref<16x128xf32, #tpu.memory_space<vmem>>, %arg2: memref<16x128xf32, #tpu.memory_space<vmem>>) attributes {dimension_semantics = [#tpu.dimension_semantics<parallel>], iteration_bounds = array<i64: 1>, scalar_prefetch = 0 : i64, scratch_operands = 0 : i64, tpu.core_type = #tpu.core_type<tc>, window_params = [{transform_indices = @transform_0, window_bounds = array<i64: 16, 128>}, {transform_indices = @transform_1, window_bounds = array<i64: 16, 128>}]} {
    %c0 = arith.constant 0 : index
    %c0_0 = arith.constant 0 : index
    %0 = vector.load %arg1[%c0, %c0_0] : memref<16x128xf32, #tpu.memory_space<vmem>>, vector<16x128xf32>
    %1 = vector.extract_strided_slice %0 {offsets = [0, 0], sizes = [16, 16], strides = [1, 1]} : vector<16x128xf32> to vector<16x16xf32>
    %2 = arith.mulf %1, %1 : vector<16x16xf32>
    %cst = arith.constant dense<0.000000e+00> : vector<16xf32>
    %3 = vector.multi_reduction <add>, %2, %cst [1] : vector<16x16xf32> to vector<16xf32>
    %4 = vector.shape_cast %3 : vector<16xf32> to vector<16x1xf32>
    %cst_1 = arith.constant 1.000000e-24 : f32
    %5 = vector.broadcast %cst_1 : f32 to vector<16x1xf32>
    %6 = arith.maximumf %4, %5 : vector<16x1xf32>
    %7 = math.rsqrt %6 : vector<16x1xf32>
    %8 = vector.broadcast %7 : vector<16x1xf32> to vector<16x16xf32>
    %9 = arith.mulf %1, %8 : vector<16x16xf32>
    %c0_2 = arith.constant 0 : index
    %c0_3 = arith.constant 0 : index
    %10 = vector.load %arg2[%c0_2, %c0_3] : memref<16x128xf32, #tpu.memory_space<vmem>>, vector<16x16xf32>
    tpu.vector_store %arg2[%c0_2, %c0_3], %9 {strides = array<i32>} : memref<16x128xf32, #tpu.memory_space<vmem>>, vector<16x16xf32>,
    %11 = vector.extract_strided_slice %0 {offsets = [0, 16], sizes = [16, 16], strides = [1, 1]} : vector<16x128xf32> to vector<16x16xf32>
    %12 = arith.mulf %11, %11 : vector<16x16xf32>
    %cst_4 = arith.constant dense<0.000000e+00> : vector<16xf32>
    %13 = vector.multi_reduction <add>, %12, %cst_4 [1] : vector<16x16xf32> to vector<16xf32>
    %14 = vector.shape_cast %13 : vector<16xf32> to vector<16x1xf32>
    %cst_5 = arith.constant 1.000000e-24 : f32
    %15 = vector.broadcast %cst_5 : f32 to vector<16x1xf32>
    %16 = arith.maximumf %14, %15 : vector<16x1xf32>
    %17 = math.rsqrt %16 : vector<16x1xf32>
    %18 = vector.broadcast %17 : vector<16x1xf32> to vector<16x16xf32>
    %19 = arith.mulf %11, %18 : vector<16x16xf32>
    %c0_6 = arith.constant 0 : index
    %c16 = arith.constant 16 : index
    %20 = vector.load %arg2[%c0_6, %c16] : memref<16x128xf32, #tpu.memory_space<vmem>>, vector<16x16xf32>
    tpu.vector_store %arg2[%c0_6, %c16], %19 {strides = array<i32>} : memref<16x128xf32, #tpu.memory_space<vmem>>, vector<16x16xf32>,
    %21 = vector.extract_strided_slice %0 {offsets = [0, 32], sizes = [16, 16], strides = [1, 1]} : vector<16x128xf32> to vector<16x16xf32>
    %22 = arith.mulf %21, %21 : vector<16x16xf32>
    %cst_7 = arith.constant dense<0.000000e+00> : vector<16xf32>
    %23 = vector.multi_reduction <add>, %22, %cst_7 [1] : vector<16x16xf32> to vector<16xf32>
    %24 = vector.shape_cast %23 : vector<16xf32> to vector<16x1xf32>
    %cst_8 = arith.constant 1.000000e-24 : f32
    %25 = vector.broadcast %cst_8 : f32 to vector<16x1xf32>
    %26 = arith.maximumf %24, %25 : vector<16x1xf32>
    %27 = math.rsqrt %26 : vector<16x1xf32>
    %28 = vector.broadcast %27 : vector<16x1xf32> to vector<16x16xf32>
    %29 = arith.mulf %21, %28 : vector<16x16xf32>
    %c0_9 = arith.constant 0 : index
    %c32 = arith.constant 32 : index
    %30 = vector.load %arg2[%c0_9, %c32] : memref<16x128xf32, #tpu.memory_space<vmem>>, vector<16x16xf32>
    tpu.vector_store %arg2[%c0_9, %c32], %29 {strides = array<i32>} : memref<16x128xf32, #tpu.memory_space<vmem>>, vector<16x16xf32>,
    %31 = vector.extract_strided_slice %0 {offsets = [0, 48], sizes = [16, 16], strides = [1, 1]} : vector<16x128xf32> to vector<16x16xf32>
    %32 = arith.mulf %31, %31 : vector<16x16xf32>
    %cst_10 = arith.constant dense<0.000000e+00> : vector<16xf32>
    %33 = vector.multi_reduction <add>, %32, %cst_10 [1] : vector<16x16xf32> to vector<16xf32>
    %34 = vector.shape_cast %33 : vector<16xf32> to vector<16x1xf32>
    %cst_11 = arith.constant 1.000000e-24 : f32
    %35 = vector.broadcast %cst_11 : f32 to vector<16x1xf32>
    %36 = arith.maximumf %34, %35 : vector<16x1xf32>
    %37 = math.rsqrt %36 : vector<16x1xf32>
    %38 = vector.broadcast %37 : vector<16x1xf32> to vector<16x16xf32>
    %39 = arith.mulf %31, %38 : vector<16x16xf32>
    %c0_12 = arith.constant 0 : index
    %c48 = arith.constant 48 : index
    %40 = vector.load %arg2[%c0_12, %c48] : memref<16x128xf32, #tpu.memory_space<vmem>>, vector<16x16xf32>
    tpu.vector_store %arg2[%c0_12, %c48], %39 {strides = array<i32>} : memref<16x128xf32, #tpu.memory_space<vmem>>, vector<16x16xf32>,
    %41 = vector.extract_strided_slice %0 {offsets = [0, 64], sizes = [16, 16], strides = [1, 1]} : vector<16x128xf32> to vector<16x16xf32>
    %42 = arith.mulf %41, %41 : vector<16x16xf32>
    %cst_13 = arith.constant dense<0.000000e+00> : vector<16xf32>
    %43 = vector.multi_reduction <add>, %42, %cst_13 [1] : vector<16x16xf32> to vector<16xf32>
    %44 = vector.shape_cast %43 : vector<16xf32> to vector<16x1xf32>
    %cst_14 = arith.constant 1.000000e-24 : f32
    %45 = vector.broadcast %cst_14 : f32 to vector<16x1xf32>
    %46 = arith.maximumf %44, %45 : vector<16x1xf32>
    %47 = math.rsqrt %46 : vector<16x1xf32>
    %48 = vector.broadcast %47 : vector<16x1xf32> to vector<16x16xf32>
    %49 = arith.mulf %41, %48 : vector<16x16xf32>
    %c0_15 = arith.constant 0 : index
    %c64 = arith.constant 64 : index
    %50 = vector.load %arg2[%c0_15, %c64] : memref<16x128xf32, #tpu.memory_space<vmem>>, vector<16x16xf32>
    tpu.vector_store %arg2[%c0_15, %c64], %49 {strides = array<i32>} : memref<16x128xf32, #tpu.memory_space<vmem>>, vector<16x16xf32>,
    %51 = vector.extract_strided_slice %0 {offsets = [0, 80], sizes = [16, 16], strides = [1, 1]} : vector<16x128xf32> to vector<16x16xf32>
    %52 = arith.mulf %51, %51 : vector<16x16xf32>
    %cst_16 = arith.constant dense<0.000000e+00> : vector<16xf32>
    %53 = vector.multi_reduction <add>, %52, %cst_16 [1] : vector<16x16xf32> to vector<16xf32>
    %54 = vector.shape_cast %53 : vector<16xf32> to vector<16x1xf32>
    %cst_17 = arith.constant 1.000000e-24 : f32
    %55 = vector.broadcast %cst_17 : f32 to vector<16x1xf32>
    %56 = arith.maximumf %54, %55 : vector<16x1xf32>
    %57 = math.rsqrt %56 : vector<16x1xf32>
    %58 = vector.broadcast %57 : vector<16x1xf32> to vector<16x16xf32>
    %59 = arith.mulf %51, %58 : vector<16x16xf32>
    %c0_18 = arith.constant 0 : index
    %c80 = arith.constant 80 : index
    %60 = vector.load %arg2[%c0_18, %c80] : memref<16x128xf32, #tpu.memory_space<vmem>>, vector<16x16xf32>
    tpu.vector_store %arg2[%c0_18, %c80], %59 {strides = array<i32>} : memref<16x128xf32, #tpu.memory_space<vmem>>, vector<16x16xf32>,
    %61 = vector.extract_strided_slice %0 {offsets = [0, 96], sizes = [16, 16], strides = [1, 1]} : vector<16x128xf32> to vector<16x16xf32>
    %62 = arith.mulf %61, %61 : vector<16x16xf32>
    %cst_19 = arith.constant dense<0.000000e+00> : vector<16xf32>
    %63 = vector.multi_reduction <add>, %62, %cst_19 [1] : vector<16x16xf32> to vector<16xf32>
    %64 = vector.shape_cast %63 : vector<16xf32> to vector<16x1xf32>
    %cst_20 = arith.constant 1.000000e-24 : f32
    %65 = vector.broadcast %cst_20 : f32 to vector<16x1xf32>
    %66 = arith.maximumf %64, %65 : vector<16x1xf32>
    %67 = math.rsqrt %66 : vector<16x1xf32>
    %68 = vector.broadcast %67 : vector<16x1xf32> to vector<16x16xf32>
    %69 = arith.mulf %61, %68 : vector<16x16xf32>
    %c0_21 = arith.constant 0 : index
    %c96 = arith.constant 96 : index
    %70 = vector.load %arg2[%c0_21, %c96] : memref<16x128xf32, #tpu.memory_space<vmem>>, vector<16x16xf32>
    tpu.vector_store %arg2[%c0_21, %c96], %69 {strides = array<i32>} : memref<16x128xf32, #tpu.memory_space<vmem>>, vector<16x16xf32>,
    %71 = vector.extract_strided_slice %0 {offsets = [0, 112], sizes = [16, 16], strides = [1, 1]} : vector<16x128xf32> to vector<16x16xf32>
    %72 = arith.mulf %71, %71 : vector<16x16xf32>
    %cst_22 = arith.constant dense<0.000000e+00> : vector<16xf32>
    %73 = vector.multi_reduction <add>, %72, %cst_22 [1] : vector<16x16xf32> to vector<16xf32>
    %74 = vector.shape_cast %73 : vector<16xf32> to vector<16x1xf32>
    %cst_23 = arith.constant 1.000000e-24 : f32
    %75 = vector.broadcast %cst_23 : f32 to vector<16x1xf32>
    %76 = arith.maximumf %74, %75 : vector<16x1xf32>
    %77 = math.rsqrt %76 : vector<16x1xf32>
    %78 = vector.broadcast %77 : vector<16x1xf32> to vector<16x16xf32>
    %79 = arith.mulf %71, %78 : vector<16x16xf32>
    %c0_24 = arith.constant 0 : index
    %c112 = arith.constant 112 : index
    %80 = vector.load %arg2[%c0_24, %c112] : memref<16x128xf32, #tpu.memory_space<vmem>>, vector<16x16xf32>
    tpu.vector_store %arg2[%c0_24, %c112], %79 {strides = array<i32>} : memref<16x128xf32, #tpu.memory_space<vmem>>, vector<16x16xf32>,
    return
  }
  func.func @transform_0(%arg0: i32) -> (i32, i32) {
    %c0_i32 = arith.constant 0 : i32
    %c0_i32_0 = arith.constant 0 : i32
    return %arg0, %c0_i32 : i32, i32
  }
  func.func @transform_1(%arg0: i32) -> (i32, i32) {
    %c0_i32 = arith.constant 0 : i32
    %c0_i32_0 = arith.constant 0 : i32
    return %arg0, %c0_i32 : i32, i32
  }
}

</mosaic_0001>

<llo_original>
// kernel: tpu_custom_call.1
$region0: #{tpu_custom_call.1}
  #allocation0 [shape = 'u32[]', space=smem, size = 0x4, offset = 0x4, fixed_abs, tag = 'smem constant byte address 0x4 - core index']
  #allocation1 [shape = 'u32[144,128]{1,0:T(1,128)}', space=vmem, size = 0x12000, scoped, tag = 'internal scratch']
  %s0 = inlined_call_operand.hbm [shape: f32[16,128], index: 0, kind: input, shape index: {}]
  %s1 = inlined_call_operand.hbm [shape: f32[16,128], index: 1, kind: output, shape index: {}]
  %s2 = sld [smem:[#allocation0]]
  $region18: #{tpu_custom_call.1} parent=0
    _
  %s4 = ssub.s32 1, %s2
  %s5 = scalar_select 0, %s4, %s2
  $region1: #{tpu_custom_call.1} parent=0
    #allocation2 [shape = 'u8[8192]{0}', space=vmem, size = 0x2000, scoped, tag = 'input window, operand 0, single buffered']
    #allocation3 [shape = 's32[1]{0}', space=sflag, size = 0x4, scoped, tag = 'scoped memory for tpu_custom_call.1']
    #allocation4 [shape = 's32[1]{0}', space=sflag, size = 0x4, scoped, tag = 'scoped memory for tpu_custom_call.1']
    #allocation5 [shape = 'u8[8192]{0}', space=vmem, size = 0x2000, scoped, tag = 'output window, operand 0, single buffered']
    %6 = vsyncpa [#allocation3], 0
    %7 = vsyncpa [#allocation4], 0
    // Predicated region
    $region2: #{tpu_custom_call.1} parent=1 // pred_check
      _
    $region3: #{tpu_custom_call.1} parent=1 // pred_check_branch
      %9 = sbr.rel (0) target = $region5
    $region4: #{tpu_custom_call.1} parent=1 // pred_region
      %s11 = ssub.s32 256, 256
      %12 = vsyncadd [#allocation3], %s11
      %s13 = sshll.u32 [#allocation2], 4
      %s14 = int_to_ptr.vmem [resolvable:$true] %s13
      %19 = dma.hbm_to_vmem [thread:$0]  %s0, 256, %s14, [#allocation3], 128, 128, 8
    $region5: #{tpu_custom_call.1} parent=1 // pred_fallthru
      _
    // Predicated region
    $region6: #{tpu_custom_call.1} parent=1 // pred_check
      _
    $region7: #{tpu_custom_call.1} parent=1 // pred_check_branch
      %21 = sbr.rel (0) target = $region9
    $region8: #{tpu_custom_call.1} parent=1 // pred_region
      %22 = dma.done [#allocation3], 256
    $region9: #{tpu_custom_call.1} parent=1 // pred_fallthru
      _
    %v23 = vld [vmem:[#allocation2] sm:$0xff]
    %v24 = vld [vmem:[#allocation2 + $0x8] sm:$0xff]
    %v25 = vmul.f32 %v23, %v23
    %v26 = vmul.f32 %v24, %v24
    %vm27 = vcmask 130048
    %v28 = vsel %vm27, %v25, 0.0
    %29 = vadd.xlane.f32.xlu0 %v28
    %v30 = vpop.xlane.xlu0 %29
    %v31 = vsel %vm27, %v26, 0.0
    %32 = vadd.xlane.f32.xlu0 %v31
    %v33 = vpop.xlane.xlu0 %32
    %v34 = vmax.f32 %v30, 1e-24
    %v35 = vmax.f32 %v33, 1e-24
    %v36 = vrsqrt.pop %v34
    %v37 = vrsqrt.pop %v35
    %v38 = vmul.f32 %v23, %v36
    %v39 = vmul.f32 %v24, %v37
    %40 = vst.msk [vmem:[#allocation5] sm:$0xff] %vm27, %v38
    %41 = vst.msk [vmem:[#allocation5 + $0x8] sm:$0xff] %vm27, %v39
    %44 = vrot.lane.b32.xlu0 %v25, 112
    %v45 = vpop.permute.xlu0 %44
    %46 = vrot.lane.b32.xlu0 %v26, 112
    %v47 = vpop.permute.xlu0 %46
    %v50 = vsel %vm27, %v45, 0.0
    %51 = vadd.xlane.f32.xlu0 %v50
    %v52 = vpop.xlane.xlu0 %51
    %v53 = vsel %vm27, %v47, 0.0
    %54 = vadd.xlane.f32.xlu0 %v53
    %v55 = vpop.xlane.xlu0 %54
    %v56 = vmax.f32 %v52, 1e-24
    %v57 = vmax.f32 %v55, 1e-24
    %v58 = vrsqrt.pop %v56
    %v59 = vrsqrt.pop %v57
    %v60 = vmul.f32 %v23, %v58
    %v61 = vmul.f32 %v24, %v59
    %vm62 = vcmask 261248
    %63 = vst.msk [vmem:[#allocation5] sm:$0xff] %vm62, %v60
    %64 = vst.msk [vmem:[#allocation5 + $0x8] sm:$0xff] %vm62, %v61
    %65 = vrot.lane.b32.xlu0 %v25, 96
    %v66 = vpop.permute.xlu0 %65
    %67 = vrot.lane.b32.xlu0 %v26, 96
    %v68 = vpop.permute.xlu0 %67
    %v71 = vsel %vm27, %v66, 0.0
    %72 = vadd.xlane.f32.xlu0 %v71
    %v73 = vpop.xlane.xlu0 %72
    %v74 = vsel %vm27, %v68, 0.0
    %75 = vadd.xlane.f32.xlu0 %v74
    %v76 = vpop.xlane.xlu0 %75
    %v77 = vmax.f32 %v73, 1e-24
    %v78 = vmax.f32 %v76, 1e-24
    %v79 = vrsqrt.pop %v77
    %v80 = vrsqrt.pop %v78
    %v81 = vmul.f32 %v23, %v79
    %v82 = vmul.f32 %v24, %v80
    %vm83 = vcmask 392448
    %84 = vst.msk [vmem:[#allocation5] sm:$0xff] %vm83, %v81
    %85 = vst.msk [vmem:[#allocation5 + $0x8] sm:$0xff] %vm83, %v82
    %86 = vrot.lane.b32.xlu0 %v25, 80
    %v87 = vpop.permute.xlu0 %86
    %88 = vrot.lane.b32.xlu0 %v26, 80
    %v89 = vpop.permute.xlu0 %88
    %v92 = vsel %vm27, %v87, 0.0
    %93 = vadd.xlane.f32.xlu0 %v92
    %v94 = vpop.xlane.xlu0 %93
    %v95 = vsel %vm27, %v89, 0.0
    %96 = vadd.xlane.f32.xlu0 %v95
    %v97 = vpop.xlane.xlu0 %96
    %v98 = vmax.f32 %v94, 1e-24
    %v99 = vmax.f32 %v97, 1e-24
    %v100 = vrsqrt.pop %v98
    %v101 = vrsqrt.pop %v99
    %v102 = vmul.f32 %v23, %v100
    %v103 = vmul.f32 %v24, %v101
    %vm104 = vcmask 523648
    %105 = vst.msk [vmem:[#allocation5] sm:$0xff] %vm104, %v102
    %106 = vst.msk [vmem:[#allocation5 + $0x8] sm:$0xff] %vm104, %v103
    %107 = vrot.lane.b32.xlu0 %v25, 64
    %v108 = vpop.permute.xlu0 %107
    %109 = vrot.lane.b32.xlu0 %v26, 64
    %v110 = vpop.permute.xlu0 %109
    %v113 = vsel %vm27, %v108, 0.0
    %114 = vadd.xlane.f32.xlu0 %v113
    %v115 = vpop.xlane.xlu0 %114
    %v116 = vsel %vm27, %v110, 0.0
    %117 = vadd.xlane.f32.xlu0 %v116
    %v118 = vpop.xlane.xlu0 %117
    %v119 = vmax.f32 %v115, 1e-24
    %v120 = vmax.f32 %v118, 1e-24
    %v121 = vrsqrt.pop %v119
    %v122 = vrsqrt.pop %v120
    %v123 = vmul.f32 %v23, %v121
    %v124 = vmul.f32 %v24, %v122
    %vm125 = vcmask 654848
    %126 = vst.msk [vmem:[#allocation5] sm:$0xff] %vm125, %v123
    %127 = vst.msk [vmem:[#allocation5 + $0x8] sm:$0xff] %vm125, %v124
    %128 = vrot.lane.b32.xlu0 %v25, 48
    %v129 = vpop.permute.xlu0 %128
    %130 = vrot.lane.b32.xlu0 %v26, 48
    %v131 = vpop.permute.xlu0 %130
    %v134 = vsel %vm27, %v129, 0.0
    %135 = vadd.xlane.f32.xlu0 %v134
    %v136 = vpop.xlane.xlu0 %135
    %v137 = vsel %vm27, %v131, 0.0
    %138 = vadd.xlane.f32.xlu0 %v137
    %v139 = vpop.xlane.xlu0 %138
    %v140 = vmax.f32 %v136, 1e-24
    %v141 = vmax.f32 %v139, 1e-24
    %v142 = vrsqrt.pop %v140
    %v143 = vrsqrt.pop %v141
    %v144 = vmul.f32 %v23, %v142
    %v145 = vmul.f32 %v24, %v143
    %vm146 = vcmask 786048
    %147 = vst.msk [vmem:[#allocation5] sm:$0xff] %vm146, %v144
    %148 = vst.msk [vmem:[#allocation5 + $0x8] sm:$0xff] %vm146, %v145
    %149 = vrot.lane.b32.xlu0 %v25, 32
    %v150 = vpop.permute.xlu0 %149
    %151 = vrot.lane.b32.xlu0 %v26, 32
    %v152 = vpop.permute.xlu0 %151
    %v155 = vsel %vm27, %v150, 0.0
    %156 = vadd.xlane.f32.xlu0 %v155
    %v157 = vpop.xlane.xlu0 %156
    %v158 = vsel %vm27, %v152, 0.0
    %159 = vadd.xlane.f32.xlu0 %v158
    %v160 = vpop.xlane.xlu0 %159
    %v161 = vmax.f32 %v157, 1e-24
    %v162 = vmax.f32 %v160, 1e-24
    %v163 = vrsqrt.pop %v161
    %v164 = vrsqrt.pop %v162
    %v165 = vmul.f32 %v23, %v163
    %v166 = vmul.f32 %v24, %v164
    %vm167 = vcmask 917248
    %168 = vst.msk [vmem:[#allocation5] sm:$0xff] %vm167, %v165
    %169 = vst.msk [vmem:[#allocation5 + $0x8] sm:$0xff] %vm167, %v166
    %170 = vrot.lane.b32.xlu0 %v25, 16
    %v171 = vpop.permute.xlu0 %170
    %172 = vrot.lane.b32.xlu0 %v26, 16
    %v173 = vpop.permute.xlu0 %172
    %v176 = vsel %vm27, %v171, 0.0
    %177 = vadd.xlane.f32.xlu0 %v176
    %v178 = vpop.xlane.xlu0 %177
    %v179 = vsel %vm27, %v173, 0.0
    %180 = vadd.xlane.f32.xlu0 %v179
    %v181 = vpop.xlane.xlu0 %180
    %v182 = vmax.f32 %v178, 1e-24
    %v183 = vmax.f32 %v181, 1e-24
    %v184 = vrsqrt.pop %v182
    %v185 = vrsqrt.pop %v183
    %v186 = vmul.f32 %v23, %v184
    %v187 = vmul.f32 %v24, %v185
    %vm188 = vcmask 1048448
    %189 = vst.msk [vmem:[#allocation5] sm:$0xff] %vm188, %v186
    %190 = vst.msk [vmem:[#allocation5 + $0x8] sm:$0xff] %vm188, %v187
    // Predicated region
    $region10: #{tpu_custom_call.1} parent=1 // pred_check
      _
    $region11: #{tpu_custom_call.1} parent=1 // pred_check_branch
      %192 = sbr.rel (0) target = $region13
    $region12: #{tpu_custom_call.1} parent=1 // pred_region
      %s194 = ssub.s32 256, 256
      %195 = vsyncadd [#allocation4], %s194
      %s196 = sshll.u32 [#allocation5], 4
      %s197 = int_to_ptr.vmem [resolvable:$true] %s196
      %202 = dma.vmem_to_hbm [thread:$0]  %s197, 256, %s1, [#allocation4], 128, 128, 8
    $region13: #{tpu_custom_call.1} parent=1 // pred_fallthru
      _
    // Predicated region
    $region14: #{tpu_custom_call.1} parent=1 // pred_check
      _
    $region15: #{tpu_custom_call.1} parent=1 // pred_check_branch
      %204 = sbr.rel (0) target = $region17
    $region16: #{tpu_custom_call.1} parent=1 // pred_region
      %205 = dma.done [#allocation4], 256
    $region17: #{tpu_custom_call.1} parent=1 // pred_fallthru
      _
    %206 = vsyncpa [#allocation3], 1
    %207 = vsyncpa [#allocation4], 1

</llo_original>
